<compile_context>
chip_gen: v7x
topology: tpu7x:2x2x1
jax: 0.10.0
libtpu: 0.0.40
codegen_flags: <defaults>
</compile_context>

<pallas_src>
import jax
import jax.numpy as jnp
import numpy as np
from jax.experimental import pallas as pl
from jax.experimental.pallas import tpu as pltpu

_LANE = 1024                      # lanes per flat row (multiple of 128 -> unmasked stores)
_FLAT_CHUNK = 8 * _LANE           # flat padding granularity: keeps rows a multiple of 8
_DC_TARGET_ROWS = 1024            # (1024,1024) f32 tile = 4 MiB/buffer -> ~8 MiB payload/step
_SCALE_TARGET_LANES = 256 * 1024  # ~4 MiB payload/step; 128*T-byte working set = 32 MiB
_VMEM_LIMIT_BYTES = 48 * 1024 * 1024  # < v7x 64 MiB physical VMEM (v5e/v6e have 128 MiB),
                                      # well above both kernels' working sets.


def _round_up(x, m):
    return ((x + m - 1) // m) * m


def _dc_kernel(s_ref, img_ref, dc_ref):
    # gauss_features_dc = (img - 0.5) * relu(colour_scaling); scalar lives in SMEM.
    dc_ref[...] = (img_ref[...] - 0.5) * s_ref[0]


def _scale_kernel(svec_ref, depth_ref, sc_ref):
    # gauss_scaling[:, c, :] = (buffer[c] * exp(scale_scaling) / 10) * depth
    # Single broadcasted multiply + one unmasked full-tile store (replaces the
    # three per-channel sublane-sliced stores of the previous version).
    sc_ref[...] = svec_ref[...] * depth_ref[...]


def _features_dc(img, col_act):
    """(img - 0.5) * relu(colour_scaling) on a fully (8,128)-dense flat 2-D view."""
    B, C, H, W = img.shape
    total = B * C * H * W
    total_p = _round_up(total, _FLAT_CHUNK)
    flat = img.reshape(-1)
    if total_p != total:          # only tiny/odd shapes; typical resolutions divide cleanly
        flat = jnp.pad(flat, (0, total_p - total))
    rows = total_p // _LANE       # multiple of 8 by construction
    x2d = flat.reshape(rows, _LANE)

    r_tile = min(_DC_TARGET_ROWS, rows)
    if rows >= 16:                # keep >= 2 grid steps so v7x's two TCs both get work
        r_tile = min(r_tile, _round_up((rows + 1) // 2, 8))
    r_tile = max(8, (r_tile // 8) * 8)
    n_r = pl.cdiv(rows, r_tile)

    cost = pl.CostEstimate(flops=2 * total_p, transcendentals=0,
                           bytes_accessed=2 * total_p * 4 + 4)
    dc2d = pl.pallas_call(
        _dc_kernel,
        grid=(n_r,),
        in_specs=[pl.BlockSpec(memory_space=pltpu.MemorySpace.SMEM),
                  pl.BlockSpec((r_tile, _LANE), lambda r: (r, 0))],
        out_specs=pl.BlockSpec((r_tile, _LANE), lambda r: (r, 0)),
        out_shape=jax.ShapeDtypeStruct((rows, _LANE), jnp.float32),
        compiler_params=pltpu.CompilerParams(
            dimension_semantics=("parallel",),
            vmem_limit_bytes=_VMEM_LIMIT_BYTES),
        cost_estimate=cost,
    )(col_act.reshape(1).astype(jnp.float32), x2d)

    dc = dc2d.reshape(-1)
    if total_p != total:
        dc = dc[:total]
    return dc.reshape(B, C, H, W)


def _depth_scaling(depth, sc_chan):
    """gauss_scaling = buffer * exp(scale_scaling) * depth / 10 (/10 folded into sc_chan)."""
    B, _, H, W = depth.shape
    N = H * W
    Np = _round_up(N, 128)
    d = depth.reshape(B, 1, N)
    if Np != N:
        d = jnp.pad(d, ((0, 0), (0, 0), (0, Np - N)))

    lane_t = Np if Np <= _SCALE_TARGET_LANES else _SCALE_TARGET_LANES
    n_t = pl.cdiv(Np, lane_t)
    if B * n_t < 2 and Np >= 256:   # give v7x's second TC something to do
        lane_t = _round_up((Np + 1) // 2, 128)
        n_t = pl.cdiv(Np, lane_t)

    svec = sc_chan.reshape(1, 3, 1).astype(jnp.float32)
    cost = pl.CostEstimate(flops=3 * B * Np, transcendentals=0,
                           bytes_accessed=4 * B * Np * 4 + 3 * 4)
    sc = pl.pallas_call(
        _scale_kernel,
        grid=(B, n_t),
        in_specs=[pl.BlockSpec((1, 3, 1), lambda b, t: (0, 0, 0)),
                  pl.BlockSpec((1, 1, lane_t), lambda b, t: (b, 0, t))],
        out_specs=pl.BlockSpec((1, 3, lane_t), lambda b, t: (b, 0, t)),
        out_shape=jax.ShapeDtypeStruct((B, 3, Np), jnp.float32),
        compiler_params=pltpu.CompilerParams(
            dimension_semantics=("parallel", "parallel"),
            vmem_limit_bytes=_VMEM_LIMIT_BYTES),
        cost_estimate=cost,
    )(svec, d)

    if Np != N:
        sc = sc[:, :, :N]
    return sc.reshape(B, 3, H, W)


def unidepth_unprojector_heads(img, depth, buffers, params, *, scale_with_depth=False):
    """Reproduces the module's head output maps.

    img:    (B, 3, H, W) f32   -- inputs['color_aug', 0, 0]
    depth:  (B, 1, H, W) f32   -- depth_outs['depth'] (UniDepth backbone output)
    buffers: (gauss_opacity(1,1,1), gauss_scaling(3,1,1), gauss_rotation(4,1,1),
              gauss_features_rest(9,1,1), gauss_offset(3,1,1))
    params:  (opacity_scaling(1,1), scale_scaling(1,1), colour_scaling(1,1))
    """
    B, C, H, W = img.shape
    assert C == 3
    g_op, g_sc, g_rot, g_rest, g_off = buffers
    op_s, sc_s, col_s = params
    f32 = jnp.float32

    # Scalar activations computed once on scalars (not per-pixel vregs).
    op_act = jax.nn.sigmoid(op_s[0, 0])
    sc_act = jnp.exp(sc_s[0, 0])
    col_act = jnp.maximum(col_s[0, 0], 0.0)

    # Per-channel-constant maps: XLA broadcast writers are already write-roofline
    # bound; pulling them into the kernel would not reduce bytes.
    gauss_opacity = jnp.broadcast_to((g_op * op_act)[None], (B, 1, H, W)).astype(f32)
    gauss_rotation = jnp.broadcast_to(g_rot[None], (B, 4, H, W)).astype(f32)
    gauss_offset = jnp.broadcast_to(g_off[None], (B, 3, H, W)).astype(f32)
    gauss_rest = jnp.broadcast_to(g_rest[None], (B, 9, H, W)).astype(f32)

    # Per-pixel-varying maps: Pallas kernels.
    gauss_dc = _features_dc(img.astype(f32), col_act)

    if scale_with_depth:
        sc_chan = (g_sc.reshape(3) * sc_act * 0.1).astype(f32)   # /10 folded in
        gauss_scaling = _depth_scaling(depth.astype(f32), sc_chan)
    else:
        gauss_scaling = jnp.broadcast_to((g_sc * sc_act)[None],
                                         (B, 3, H, W)).astype(f32)

    # Depth pass-through: returned directly, no HBM->VMEM->HBM copy.
    return (gauss_opacity, gauss_scaling, gauss_rotation, gauss_offset,
            gauss_rest, gauss_dc, depth)


if __name__ == "__main__":
    key = jax.random.PRNGKey(0)
    B, C, H, W = 2, 3, 16, 16
    k_img, k_depth = jax.random.split(key)

    # inputs['color_aug', 0, 0]
    img = jax.random.uniform(k_img, (B, C, H, W), dtype=jnp.float32)
    # inputs['K_src', 0] -- only consumed by the (not reproduced) UniDepth
    # backbone; constructed for input faithfulness, unused by the kernels.
    K_src = jnp.broadcast_to(
        jnp.array([[20.0, 0.0, W / 2.0],
                   [0.0, 20.0, H / 2.0],
                   [0.0, 0.0, 1.0]], dtype=jnp.float32), (B, 3, 3))
    # TODO(synk): synthetic stand-in for depth_outs['depth'] from UniDepthV1.
    depth = 1.0 + 4.0 * jax.random.uniform(k_depth, (B, 1, H, W),
                                           dtype=jnp.float32)

    # registered buffers (exactly as in __init__)
    g_op = jnp.ones((1, 1, 1), jnp.float32)
    g_sc = jnp.ones((3, 1, 1), jnp.float32)
    g_rot = jnp.full((4, 1, 1), 0.5, jnp.float32)
    g_rest = jnp.zeros((9, 1, 1), jnp.float32)
    g_off = jnp.zeros((3, 1, 1), jnp.float32)

    # learnable scalars (deterministic stand-ins for cfg.model.* biases)
    op_s = jnp.full((1, 1), 2.0, jnp.float32)     # opacity_bias
    sc_s = jnp.full((1, 1), -3.0, jnp.float32)    # scale_bias
    col_s = jnp.full((1, 1), 1.5, jnp.float32)    # colour_scale

    outs = unidepth_unprojector_heads(
        img, depth, (g_op, g_sc, g_rot, g_rest, g_off), (op_s, sc_s, col_s),
        scale_with_depth=False)
    outs = jax.block_until_ready(outs)
    (o_op, o_sc, o_rot, o_off, o_rest, o_dc, o_depth) = outs

    # plain-JAX / numpy reference check
    ref_op = np.broadcast_to(np.asarray(g_op)[None], (B, 1, H, W)) \
        * float(jax.nn.sigmoid(op_s)[0, 0])
    ref_sc = np.broadcast_to(np.asarray(g_sc)[None], (B, 3, H, W)) \
        * float(jnp.exp(sc_s)[0, 0])
    ref_rot = np.broadcast_to(np.asarray(g_rot)[None], (B, 4, H, W))
    ref_off = np.broadcast_to(np.asarray(g_off)[None], (B, 3, H, W))
    ref_rest = np.broadcast_to(np.asarray(g_rest)[None], (B, 9, H, W))
    ref_dc = (np.asarray(img) - 0.5) * max(float(col_s[0, 0]), 0.0)
    assert np.allclose(np.asarray(o_op), ref_op, atol=1e-6)
    assert np.allclose(np.asarray(o_sc), ref_sc, atol=1e-6)
    assert np.allclose(np.asarray(o_rot), ref_rot, atol=1e-6)
    assert np.allclose(np.asarray(o_off), ref_off, atol=1e-6)
    assert np.allclose(np.asarray(o_rest), ref_rest, atol=1e-6)
    assert np.allclose(np.asarray(o_dc), ref_dc, atol=1e-6)
    assert np.allclose(np.asarray(o_depth), np.asarray(depth), atol=1e-6)

    # also exercise the scale_with_depth branch (scaling computed in-kernel)
    outs_d = jax.block_until_ready(unidepth_unprojector_heads(
        img, depth, (g_op, g_sc, g_rot, g_rest, g_off), (op_s, sc_s, col_s),
        scale_with_depth=True))
    ref_sc_d = ref_sc * np.asarray(depth) / 10.0
    assert np.allclose(np.asarray(outs_d[1]), ref_sc_d, atol=1e-6)
    assert np.allclose(np.asarray(outs_d[5]), ref_dc, atol=1e-6)

    print("KERNEL_OK")
</pallas_src>

<mosaic_0001>
module attributes {stable_mosaic.version = 11 : i64} {
  func.func @_dc_kernel(%arg0: i32, %arg1: memref<1xf32, #tpu.memory_space<smem>>, %arg2: memref<8x1024xf32, #tpu.memory_space<vmem>>, %arg3: memref<8x1024xf32, #tpu.memory_space<vmem>>) attributes {dimension_semantics = [#tpu.dimension_semantics<parallel>], iteration_bounds = array<i64: 1>, scalar_prefetch = 0 : i64, scratch_operands = 0 : i64, tpu.core_type = #tpu.core_type<tc>, window_params = [{transform_indices = @transform_0, window_bounds = array<i64: 1>}, {transform_indices = @transform_1, window_bounds = array<i64: 8, 1024>}, {transform_indices = @transform_2, window_bounds = array<i64: 8, 1024>}]} {
    %c0 = arith.constant 0 : index
    %c0_0 = arith.constant 0 : index
    %0 = vector.load %arg2[%c0, %c0_0] : memref<8x1024xf32, #tpu.memory_space<vmem>>, vector<8x1024xf32>
    %cst = arith.constant 5.000000e-01 : f32
    %1 = vector.broadcast %cst : f32 to vector<8x1024xf32>
    %2 = arith.subf %0, %1 : vector<8x1024xf32>
    %c0_1 = arith.constant 0 : index
    %3 = memref.load %arg1[%c0_1] : memref<1xf32, #tpu.memory_space<smem>>
    %4 = vector.broadcast %3 : f32 to vector<8x1024xf32>
    %5 = arith.mulf %2, %4 : vector<8x1024xf32>
    %c0_2 = arith.constant 0 : index
    %c0_3 = arith.constant 0 : index
    %6 = vector.load %arg3[%c0_2, %c0_3] : memref<8x1024xf32, #tpu.memory_space<vmem>>, vector<8x1024xf32>
    tpu.vector_store %arg3[%c0_2, %c0_3], %5 {strides = array<i32>} : memref<8x1024xf32, #tpu.memory_space<vmem>>, vector<8x1024xf32>,
    return
  }
  func.func @transform_0(%arg0: i32) -> i32 {
    %c0_i32 = arith.constant 0 : i32
    %c0_i32_0 = arith.constant 0 : i32
    return %c0_i32 : i32
  }
  func.func @transform_1(%arg0: i32) -> (i32, i32) {
    %c0_i32 = arith.constant 0 : i32
    %c0_i32_0 = arith.constant 0 : i32
    return %arg0, %c0_i32 : i32, i32
  }
  func.func @transform_2(%arg0: i32) -> (i32, i32) {
    %c0_i32 = arith.constant 0 : i32
    %c0_i32_0 = arith.constant 0 : i32
    return %arg0, %c0_i32 : i32, i32
  }
}

</mosaic_0001>

<llo_original>
// kernel: tpu_custom_call.1
$region0: #{tpu_custom_call.1}
  #allocation0 [shape = 'u32[]', space=smem, size = 0x4, offset = 0x4, fixed_abs, tag = 'smem constant byte address 0x4 - core index']
  #allocation1 [shape = 'u32[144,128]{1,0:T(1,128)}', space=vmem, size = 0x12000, scoped, tag = 'internal scratch']
  #allocation2 [shape = 'f32[1]{0:T(128)S(6)}', space=smem, size = 0x200, scoped, tag = 'scoped memory for tpu_custom_call.1']
  %s0 = inlined_call_operand.<no memory space> [shape: f32[1], index: 0, kind: input, shape index: {}]
  %s1 = inlined_call_operand.hbm [shape: f32[8,1024], index: 1, kind: input, shape index: {}]
  %s2 = inlined_call_operand.hbm [shape: f32[8,1024], index: 2, kind: output, shape index: {}]
  %s3 = sld [smem:[#allocation0]]
  $region22: #{tpu_custom_call.1} parent=0
    _
  %s5 = ssub.s32 1, %s3
  %s6 = scalar_select 0, %s5, %s3
  %7 = sst [smem:[#allocation2]] %s0
  $region1: #{tpu_custom_call.1} parent=0
    #allocation3 [shape = 'u8[32768]{0}', space=vmem, size = 0x8000, scoped, tag = 'input window, operand 1, single buffered']
    #allocation4 [shape = 's32[1]{0}', space=sflag, size = 0x4, scoped, tag = 'scoped memory for tpu_custom_call.1']
    #allocation5 [shape = 's32[1]{0}', space=sflag, size = 0x4, scoped, tag = 'scoped memory for tpu_custom_call.1']
    #allocation6 [shape = 'u8[32768]{0}', space=vmem, size = 0x8000, scoped, tag = 'output window, operand 0, single buffered']
    %8 = vsyncpa [#allocation4], 0
    %9 = vsyncpa [#allocation5], 0
    // Predicated region
    $region2: #{tpu_custom_call.1} parent=1 // pred_check
      _
    $region3: #{tpu_custom_call.1} parent=1 // pred_check_branch
      %11 = sbr.rel (0) target = $region5
    $region4: #{tpu_custom_call.1} parent=1 // pred_region
      _
    $region5: #{tpu_custom_call.1} parent=1 // pred_fallthru
      _
    // Predicated region
    $region6: #{tpu_custom_call.1} parent=1 // pred_check
      _
    $region7: #{tpu_custom_call.1} parent=1 // pred_check_branch
      %13 = sbr.rel (0) target = $region9
    $region8: #{tpu_custom_call.1} parent=1 // pred_region
      %s15 = ssub.s32 1024, 1024
      %16 = vsyncadd [#allocation4], %s15
      %s18 = sshll.u32 [#allocation3], 4
      %s19 = int_to_ptr.vmem [resolvable:$true] %s18
      %21 = dma.hbm_to_vmem [thread:$0]  %s1, 1024, %s19, [#allocation4]
    $region9: #{tpu_custom_call.1} parent=1 // pred_fallthru
      _
    // Predicated region
    $region10: #{tpu_custom_call.1} parent=1 // pred_check
      _
    $region11: #{tpu_custom_call.1} parent=1 // pred_check_branch
      %23 = sbr.rel (0) target = $region13
    $region12: #{tpu_custom_call.1} parent=1 // pred_region
      %24 = dma.done [#allocation4], 1024
    $region13: #{tpu_custom_call.1} parent=1 // pred_fallthru
      _
    %v25 = vld [vmem:[#allocation3] sm:$0xff]
    %v26 = vld [vmem:[#allocation3 + $0x8] sm:$0xff]
    %v27 = vld [vmem:[#allocation3 + $0x10] sm:$0xff]
    %v28 = vld [vmem:[#allocation3 + $0x18] sm:$0xff]
    %v29 = vld [vmem:[#allocation3 + $0x20] sm:$0xff]
    %v30 = vld [vmem:[#allocation3 + $0x28] sm:$0xff]
    %v31 = vld [vmem:[#allocation3 + $0x30] sm:$0xff]
    %v32 = vld [vmem:[#allocation3 + $0x38] sm:$0xff]
    %v33 = vsub.f32 %v25, 0.5
    %v34 = vsub.f32 %v26, 0.5
    %v35 = vsub.f32 %v27, 0.5
    %v36 = vsub.f32 %v28, 0.5
    %v37 = vsub.f32 %v29, 0.5
    %v38 = vsub.f32 %v30, 0.5
    %v39 = vsub.f32 %v31, 0.5
    %v40 = vsub.f32 %v32, 0.5
    %s41 = sld [smem:[#allocation2]]
    %v42 = vstv %s41
    %v43 = vmul.f32 %v33, %v42
    %v44 = vmul.f32 %v34, %v42
    %v45 = vmul.f32 %v35, %v42
    %v46 = vmul.f32 %v36, %v42
    %v47 = vmul.f32 %v37, %v42
    %v48 = vmul.f32 %v38, %v42
    %v49 = vmul.f32 %v39, %v42
    %v50 = vmul.f32 %v40, %v42
    %51 = vst [vmem:[#allocation6] sm:$0xff] %v43
    %52 = vst [vmem:[#allocation6 + $0x8] sm:$0xff] %v44
    %53 = vst [vmem:[#allocation6 + $0x10] sm:$0xff] %v45
    %54 = vst [vmem:[#allocation6 + $0x18] sm:$0xff] %v46
    %55 = vst [vmem:[#allocation6 + $0x20] sm:$0xff] %v47
    %56 = vst [vmem:[#allocation6 + $0x28] sm:$0xff] %v48
    %57 = vst [vmem:[#allocation6 + $0x30] sm:$0xff] %v49
    %58 = vst [vmem:[#allocation6 + $0x38] sm:$0xff] %v50
    // Predicated region
    $region14: #{tpu_custom_call.1} parent=1 // pred_check
      _
    $region15: #{tpu_custom_call.1} parent=1 // pred_check_branch
      %60 = sbr.rel (0) target = $region17
    $region16: #{tpu_custom_call.1} parent=1 // pred_region
      %s62 = ssub.s32 1024, 1024
      %63 = vsyncadd [#allocation5], %s62
      %s65 = sshll.u32 [#allocation6], 4
      %s66 = int_to_ptr.vmem [resolvable:$true] %s65
      %68 = dma.vmem_to_hbm [thread:$0]  %s66, 1024, %s2, [#allocation5]
    $region17: #{tpu_custom_call.1} parent=1 // pred_fallthru
      _
    // Predicated region
    $region18: #{tpu_custom_call.1} parent=1 // pred_check
      _
    $region19: #{tpu_custom_call.1} parent=1 // pred_check_branch
      %70 = sbr.rel (0) target = $region21
    $region20: #{tpu_custom_call.1} parent=1 // pred_region
      %71 = dma.done [#allocation5], 1024
    $region21: #{tpu_custom_call.1} parent=1 // pred_fallthru
      _
    %72 = vsyncpa [#allocation4], 1
    %73 = vsyncpa [#allocation5], 1

</llo_original>
